<compile_context>
chip_gen: v7x
topology: tpu7x:2x2x1
jax: 0.10.0
libtpu: 0.0.40
codegen_flags: <defaults>
</compile_context>

<pallas_src>
import math

import jax
import jax.numpy as jnp
from jax.experimental import pallas as pl
from jax.experimental.pallas import tpu as pltpu

# ----- module hyper-parameters (small, consistent with the nn.Module) --------
CHANNELS = 2
WIDTH = 4
C = CHANNELS * WIDTH                    # feature dim of (T, N, C) inputs
KERNEL_WIDTHS = (2, 4, 8)               # multi-scale temporal kernel sizes
KMAX = max(KERNEL_WIDTHS)               # width of the folded conv
N = 2                                   # batch
T_IN = 16                               # input sequence length
T_OUT = T_IN - KMAX + 1                 # min over branches of (T_in - k + 1)
LN_EPS = 1e-5


# ---------------- fused kernel: folded conv + ReLU + residual + LayerNorm ----
def _fused_tds_block_kernel(x_ref, w_ref, b_ref, g_ref, bb_ref, out_ref):
    # x_ref  : (1, Cc, W, T_in)   VMEM  one batch element, NCHW conv layout
    # w_ref  : (Cc*Cc*KMAX,)      SMEM  folded conv(+merge) weights, (o,ci,dk) row-major
    # b_ref  : (Cc,)              SMEM  folded bias
    # g_ref  : (Cc, W, 1)         VMEM  LayerNorm gamma in conv layout
    # bb_ref : (Cc, W, 1)         VMEM  LayerNorm beta  in conv layout
    # out_ref: (1, Cc, W, T_out)  VMEM
    t_in = x_ref.shape[-1]
    t_out = out_ref.shape[-1]
    cc, width = out_ref.shape[1], out_ref.shape[2]
    n_feat = cc * width

    xb = x_ref[0]                                        # (Cc, W, T_in)

    # Hoist the time-shifted views once per (input channel, tap); reused for
    # every output channel.
    xsh = [[xb[ci, :, dk:dk + t_out] for dk in range(KMAX)] for ci in range(cc)]

    # Folded multi-scale conv + 1x1 merge, then ReLU, then residual add.
    # (For large channel counts this contraction should move to the MXU via an
    #  im2col dot_general; at Cc=2 the unrolled VPU form is cheaper.)
    z = []
    for o in range(cc):
        acc = jnp.zeros((width, t_out), jnp.float32) + b_ref[o]
        for ci in range(cc):
            base = (o * cc + ci) * KMAX
            for dk in range(KMAX):
                acc = acc + w_ref[base + dk] * xsh[ci][dk]
        y_o = jnp.maximum(acc, 0.0)                      # ReLU (after the merge)
        z.append(y_o + xb[o, :, t_in - t_out:])          # residual: inputs[-T_out:]

    # LayerNorm over the (Cc, W) feature group per time step.  With one batch
    # element per grid step the group is "everything but the lane (time) axis":
    # an unrolled leading-dim add plus a sublane reduce -- no cross-lane reduce.
    total = z[0]
    for o in range(1, cc):
        total = total + z[o]
    mean = jnp.sum(total, axis=0, keepdims=True) * (1.0 / n_feat)      # (1, T_out)
    cen = [z[o] - mean for o in range(cc)]
    sq = cen[0] * cen[0]
    for o in range(1, cc):
        sq = sq + cen[o] * cen[o]
    var = jnp.sum(sq, axis=0, keepdims=True) * (1.0 / n_feat)          # (1, T_out)
    inv = jax.lax.rsqrt(var + LN_EPS)
    for o in range(cc):
        out_ref[0, o] = (cen[o] * inv) * g_ref[o] + bb_ref[o]


# ----------------------------- wrapper ---------------------------------------
def multi_scale_tds_conv2d_block(inputs, params):
    """inputs: (T_in, N, C) float32 -> (T_out, N, C) float32."""
    t_in, n, c = inputs.shape
    assert c == CHANNELS * WIDTH
    kmax = max(KERNEL_WIDTHS)
    t_out = t_in - kmax + 1

    # --- fold the 1x1 merge conv into the branch convs (exact: ReLU follows merge)
    hp = jax.lax.Precision.HIGHEST
    w_eff = jnp.zeros((CHANNELS, CHANNELS, kmax), jnp.float32)
    b_eff = params["bm"].astype(jnp.float32)
    for bi, k in enumerate(KERNEL_WIDTHS):
        wm_b = params["wm"][:, bi * CHANNELS:(bi + 1) * CHANNELS]       # (Co, Cb)
        w_eff = w_eff.at[:, :, :k].add(
            jnp.einsum("oc,cik->oik", wm_b, params[f"w{bi}"], precision=hp))
        b_eff = b_eff + jnp.einsum("oc,c->o", wm_b, params[f"b{bi}"], precision=hp)
    w_flat = w_eff.reshape(-1)              # 1-D for SMEM (no 2-D SMEM padding)

    # --- single relayout into the module's own NCHW conv layout
    x_nchw = jnp.moveaxis(inputs, 0, -1).reshape(n, CHANNELS, WIDTH, t_in)
    g_conv = params["gamma"].reshape(CHANNELS, WIDTH, 1).astype(jnp.float32)
    b_conv = params["beta"].reshape(CHANNELS, WIDTH, 1).astype(jnp.float32)

    smem = pl.BlockSpec(memory_space=pltpu.MemorySpace.SMEM)

    out_conv = pl.pallas_call(
        _fused_tds_block_kernel,
        out_shape=jax.ShapeDtypeStruct((n, CHANNELS, WIDTH, t_out), jnp.float32),
        grid=(n,),
        in_specs=[
            pl.BlockSpec((1, CHANNELS, WIDTH, t_in), lambda i: (i, 0, 0, 0)),
            smem,                                   # folded weights (32 scalars)
            smem,                                   # folded bias (2 scalars)
            pl.BlockSpec((CHANNELS, WIDTH, 1), lambda i: (0, 0, 0)),
            pl.BlockSpec((CHANNELS, WIDTH, 1), lambda i: (0, 0, 0)),
        ],
        out_specs=pl.BlockSpec((1, CHANNELS, WIDTH, t_out), lambda i: (i, 0, 0, 0)),
        compiler_params=pltpu.CompilerParams(
            dimension_semantics=("parallel",)),     # shard batch over v7x's 2 TCs
    )(x_nchw, w_flat, b_eff, g_conv, b_conv)

    # --- single relayout back to the module's (T_out, N, C) output layout
    return jnp.moveaxis(out_conv.reshape(n, c, t_out), -1, 0)


# ---------------------- deterministic parameter init -------------------------
def init_params(key):
    params = {}
    nb = len(KERNEL_WIDTHS)
    keys = jax.random.split(key, 2 * nb + 2)
    for i, k in enumerate(KERNEL_WIDTHS):
        bound = 1.0 / math.sqrt(CHANNELS * k)           # Conv2d default-ish init
        params[f"w{i}"] = jax.random.uniform(
            keys[2 * i], (CHANNELS, CHANNELS, k), jnp.float32, -bound, bound)
        params[f"b{i}"] = jax.random.uniform(
            keys[2 * i + 1], (CHANNELS,), jnp.float32, -bound, bound)
    bound = 1.0 / math.sqrt(nb * CHANNELS)
    params["wm"] = jax.random.uniform(
        keys[2 * nb], (CHANNELS, nb * CHANNELS), jnp.float32, -bound, bound)
    params["bm"] = jax.random.uniform(
        keys[2 * nb + 1], (CHANNELS,), jnp.float32, -bound, bound)
    params["gamma"] = jnp.ones((C,), jnp.float32)       # LayerNorm defaults
    params["beta"] = jnp.zeros((C,), jnp.float32)
    return params


# ---------------------- pure-JAX reference (mirrors the PyTorch module) ------
def reference(inputs, params):
    t_in, n, c = inputs.shape
    x = jnp.moveaxis(inputs, 0, -1).reshape(n, CHANNELS, WIDTH, t_in)
    t_out = t_in - max(KERNEL_WIDTHS) + 1
    hp = jax.lax.Precision.HIGHEST
    feats = []
    for i, k in enumerate(KERNEL_WIDTHS):
        w = params[f"w{i}"]                             # (Co, Ci, k)
        acc = jnp.zeros((n, CHANNELS, WIDTH, t_out), jnp.float32)
        for dk in range(k):
            acc = acc + jnp.einsum("oi,niwt->nowt", w[:, :, dk],
                                   x[..., dk:dk + t_out], precision=hp)
        feats.append(acc + params[f"b{i}"][None, :, None, None])
    cat = jnp.concatenate(feats, axis=1)
    merged = (jnp.einsum("oc,ncwt->nowt", params["wm"], cat, precision=hp)
              + params["bm"][None, :, None, None])
    merged = jax.nn.relu(merged)
    y = jnp.moveaxis(merged.reshape(n, c, t_out), -1, 0)
    y = y + inputs[t_in - t_out:]
    mean = y.mean(-1, keepdims=True)
    var = ((y - mean) ** 2).mean(-1, keepdims=True)
    return (y - mean) / jnp.sqrt(var + LN_EPS) * params["gamma"] + params["beta"]


if __name__ == "__main__":
    key = jax.random.PRNGKey(0)
    pkey, xkey = jax.random.split(key)
    params = init_params(pkey)
    inputs = jax.random.normal(xkey, (T_IN, N, C), jnp.float32)

    fwd = jax.jit(multi_scale_tds_conv2d_block)
    out = fwd(inputs, params)
    jax.block_until_ready(out)

    assert out.shape == (T_OUT, N, C), out.shape
    ref = reference(inputs, params)
    max_err = float(jnp.max(jnp.abs(out - ref)))
    if not jnp.allclose(out, ref, atol=2e-3, rtol=2e-3):
        raise AssertionError(f"kernel/reference mismatch, max abs err = {max_err}")
    print("KERNEL_OK")
</pallas_src>

<mosaic_0001>
module attributes {stable_mosaic.version = 11 : i64} {
  func.func @_fused_tds_block_kernel(%arg0: i32, %arg1: memref<1x2x4x16xf32, #tpu.memory_space<vmem>>, %arg2: memref<32xf32, #tpu.memory_space<smem>>, %arg3: memref<2xf32, #tpu.memory_space<smem>>, %arg4: memref<2x4x1xf32, #tpu.memory_space<vmem>>, %arg5: memref<2x4x1xf32, #tpu.memory_space<vmem>>, %arg6: memref<1x2x4x9xf32, #tpu.memory_space<vmem>>) attributes {dimension_semantics = [#tpu.dimension_semantics<parallel>], iteration_bounds = array<i64: 2>, scalar_prefetch = 0 : i64, scratch_operands = 0 : i64, tpu.core_type = #tpu.core_type<tc>, window_params = [{transform_indices = @transform_0, window_bounds = array<i64: 1, 2, 4, 16>}, {transform_indices = @transform_1, window_bounds = array<i64: 32>}, {transform_indices = @transform_2, window_bounds = array<i64: 2>}, {pipeline_mode = #tpu.pipeline_mode<synchronous>, transform_indices = @transform_3, window_bounds = array<i64: 2, 4, 1>}, {pipeline_mode = #tpu.pipeline_mode<synchronous>, transform_indices = @transform_4, window_bounds = array<i64: 2, 4, 1>}, {transform_indices = @transform_5, window_bounds = array<i64: 1, 2, 4, 9>}]} {
    %c0 = arith.constant 0 : index
    %c0_0 = arith.constant 0 : index
    %c0_1 = arith.constant 0 : index
    %c0_2 = arith.constant 0 : index
    %0 = vector.load %arg1[%c0, %c0_0, %c0_1, %c0_2] : memref<1x2x4x16xf32, #tpu.memory_space<vmem>>, vector<1x2x4x16xf32>
    %1 = vector.shape_cast %0 : vector<1x2x4x16xf32> to vector<2x4x16xf32>
    %2 = vector.extract_strided_slice %1 {offsets = [0, 0, 0], sizes = [1, 4, 9], strides = [1, 1, 1]} : vector<2x4x16xf32> to vector<1x4x9xf32>
    %3 = vector.shape_cast %2 : vector<1x4x9xf32> to vector<4x9xf32>
    %4 = vector.extract_strided_slice %1 {offsets = [0, 0, 1], sizes = [1, 4, 9], strides = [1, 1, 1]} : vector<2x4x16xf32> to vector<1x4x9xf32>
    %5 = vector.shape_cast %4 : vector<1x4x9xf32> to vector<4x9xf32>
    %6 = vector.extract_strided_slice %1 {offsets = [0, 0, 2], sizes = [1, 4, 9], strides = [1, 1, 1]} : vector<2x4x16xf32> to vector<1x4x9xf32>
    %7 = vector.shape_cast %6 : vector<1x4x9xf32> to vector<4x9xf32>
    %8 = vector.extract_strided_slice %1 {offsets = [0, 0, 3], sizes = [1, 4, 9], strides = [1, 1, 1]} : vector<2x4x16xf32> to vector<1x4x9xf32>
    %9 = vector.shape_cast %8 : vector<1x4x9xf32> to vector<4x9xf32>
    %10 = vector.extract_strided_slice %1 {offsets = [0, 0, 4], sizes = [1, 4, 9], strides = [1, 1, 1]} : vector<2x4x16xf32> to vector<1x4x9xf32>
    %11 = vector.shape_cast %10 : vector<1x4x9xf32> to vector<4x9xf32>
    %12 = vector.extract_strided_slice %1 {offsets = [0, 0, 5], sizes = [1, 4, 9], strides = [1, 1, 1]} : vector<2x4x16xf32> to vector<1x4x9xf32>
    %13 = vector.shape_cast %12 : vector<1x4x9xf32> to vector<4x9xf32>
    %14 = vector.extract_strided_slice %1 {offsets = [0, 0, 6], sizes = [1, 4, 9], strides = [1, 1, 1]} : vector<2x4x16xf32> to vector<1x4x9xf32>
    %15 = vector.shape_cast %14 : vector<1x4x9xf32> to vector<4x9xf32>
    %16 = vector.extract_strided_slice %1 {offsets = [0, 0, 7], sizes = [1, 4, 9], strides = [1, 1, 1]} : vector<2x4x16xf32> to vector<1x4x9xf32>
    %17 = vector.shape_cast %16 : vector<1x4x9xf32> to vector<4x9xf32>
    %18 = vector.extract_strided_slice %1 {offsets = [1, 0, 0], sizes = [1, 4, 9], strides = [1, 1, 1]} : vector<2x4x16xf32> to vector<1x4x9xf32>
    %19 = vector.shape_cast %18 : vector<1x4x9xf32> to vector<4x9xf32>
    %20 = vector.extract_strided_slice %1 {offsets = [1, 0, 1], sizes = [1, 4, 9], strides = [1, 1, 1]} : vector<2x4x16xf32> to vector<1x4x9xf32>
    %21 = vector.shape_cast %20 : vector<1x4x9xf32> to vector<4x9xf32>
    %22 = vector.extract_strided_slice %1 {offsets = [1, 0, 2], sizes = [1, 4, 9], strides = [1, 1, 1]} : vector<2x4x16xf32> to vector<1x4x9xf32>
    %23 = vector.shape_cast %22 : vector<1x4x9xf32> to vector<4x9xf32>
    %24 = vector.extract_strided_slice %1 {offsets = [1, 0, 3], sizes = [1, 4, 9], strides = [1, 1, 1]} : vector<2x4x16xf32> to vector<1x4x9xf32>
    %25 = vector.shape_cast %24 : vector<1x4x9xf32> to vector<4x9xf32>
    %26 = vector.extract_strided_slice %1 {offsets = [1, 0, 4], sizes = [1, 4, 9], strides = [1, 1, 1]} : vector<2x4x16xf32> to vector<1x4x9xf32>
    %27 = vector.shape_cast %26 : vector<1x4x9xf32> to vector<4x9xf32>
    %28 = vector.extract_strided_slice %1 {offsets = [1, 0, 5], sizes = [1, 4, 9], strides = [1, 1, 1]} : vector<2x4x16xf32> to vector<1x4x9xf32>
    %29 = vector.shape_cast %28 : vector<1x4x9xf32> to vector<4x9xf32>
    %30 = vector.extract_strided_slice %1 {offsets = [1, 0, 6], sizes = [1, 4, 9], strides = [1, 1, 1]} : vector<2x4x16xf32> to vector<1x4x9xf32>
    %31 = vector.shape_cast %30 : vector<1x4x9xf32> to vector<4x9xf32>
    %32 = vector.extract_strided_slice %1 {offsets = [1, 0, 7], sizes = [1, 4, 9], strides = [1, 1, 1]} : vector<2x4x16xf32> to vector<1x4x9xf32>
    %33 = vector.shape_cast %32 : vector<1x4x9xf32> to vector<4x9xf32>
    %cst = arith.constant 0.000000e+00 : f32
    %34 = vector.broadcast %cst : f32 to vector<4x9xf32>
    %c0_3 = arith.constant 0 : index
    %35 = memref.load %arg3[%c0_3] : memref<2xf32, #tpu.memory_space<smem>>
    %36 = vector.broadcast %35 : f32 to vector<4x9xf32>
    %37 = arith.addf %34, %36 : vector<4x9xf32>
    %c0_4 = arith.constant 0 : index
    %38 = memref.load %arg2[%c0_4] : memref<32xf32, #tpu.memory_space<smem>>
    %39 = vector.broadcast %38 : f32 to vector<4x9xf32>
    %40 = arith.mulf %39, %3 : vector<4x9xf32>
    %41 = arith.addf %37, %40 : vector<4x9xf32>
    %c1 = arith.constant 1 : index
    %42 = memref.load %arg2[%c1] : memref<32xf32, #tpu.memory_space<smem>>
    %43 = vector.broadcast %42 : f32 to vector<4x9xf32>
    %44 = arith.mulf %43, %5 : vector<4x9xf32>
    %45 = arith.addf %41, %44 : vector<4x9xf32>
    %c2 = arith.constant 2 : index
    %46 = memref.load %arg2[%c2] : memref<32xf32, #tpu.memory_space<smem>>
    %47 = vector.broadcast %46 : f32 to vector<4x9xf32>
    %48 = arith.mulf %47, %7 : vector<4x9xf32>
    %49 = arith.addf %45, %48 : vector<4x9xf32>
    %c3 = arith.constant 3 : index
    %50 = memref.load %arg2[%c3] : memref<32xf32, #tpu.memory_space<smem>>
    %51 = vector.broadcast %50 : f32 to vector<4x9xf32>
    %52 = arith.mulf %51, %9 : vector<4x9xf32>
    %53 = arith.addf %49, %52 : vector<4x9xf32>
    %c4 = arith.constant 4 : index
    %54 = memref.load %arg2[%c4] : memref<32xf32, #tpu.memory_space<smem>>
    %55 = vector.broadcast %54 : f32 to vector<4x9xf32>
    %56 = arith.mulf %55, %11 : vector<4x9xf32>
    %57 = arith.addf %53, %56 : vector<4x9xf32>
    %c5 = arith.constant 5 : index
    %58 = memref.load %arg2[%c5] : memref<32xf32, #tpu.memory_space<smem>>
    %59 = vector.broadcast %58 : f32 to vector<4x9xf32>
    %60 = arith.mulf %59, %13 : vector<4x9xf32>
    %61 = arith.addf %57, %60 : vector<4x9xf32>
    %c6 = arith.constant 6 : index
    %62 = memref.load %arg2[%c6] : memref<32xf32, #tpu.memory_space<smem>>
    %63 = vector.broadcast %62 : f32 to vector<4x9xf32>
    %64 = arith.mulf %63, %15 : vector<4x9xf32>
    %65 = arith.addf %61, %64 : vector<4x9xf32>
    %c7 = arith.constant 7 : index
    %66 = memref.load %arg2[%c7] : memref<32xf32, #tpu.memory_space<smem>>
    %67 = vector.broadcast %66 : f32 to vector<4x9xf32>
    %68 = arith.mulf %67, %17 : vector<4x9xf32>
    %69 = arith.addf %65, %68 : vector<4x9xf32>
    %c8 = arith.constant 8 : index
    %70 = memref.load %arg2[%c8] : memref<32xf32, #tpu.memory_space<smem>>
    %71 = vector.broadcast %70 : f32 to vector<4x9xf32>
    %72 = arith.mulf %71, %19 : vector<4x9xf32>
    %73 = arith.addf %69, %72 : vector<4x9xf32>
    %c9 = arith.constant 9 : index
    %74 = memref.load %arg2[%c9] : memref<32xf32, #tpu.memory_space<smem>>
    %75 = vector.broadcast %74 : f32 to vector<4x9xf32>
    %76 = arith.mulf %75, %21 : vector<4x9xf32>
    %77 = arith.addf %73, %76 : vector<4x9xf32>
    %c10 = arith.constant 10 : index
    %78 = memref.load %arg2[%c10] : memref<32xf32, #tpu.memory_space<smem>>
    %79 = vector.broadcast %78 : f32 to vector<4x9xf32>
    %80 = arith.mulf %79, %23 : vector<4x9xf32>
    %81 = arith.addf %77, %80 : vector<4x9xf32>
    %c11 = arith.constant 11 : index
    %82 = memref.load %arg2[%c11] : memref<32xf32, #tpu.memory_space<smem>>
    %83 = vector.broadcast %82 : f32 to vector<4x9xf32>
    %84 = arith.mulf %83, %25 : vector<4x9xf32>
    %85 = arith.addf %81, %84 : vector<4x9xf32>
    %c12 = arith.constant 12 : index
    %86 = memref.load %arg2[%c12] : memref<32xf32, #tpu.memory_space<smem>>
    %87 = vector.broadcast %86 : f32 to vector<4x9xf32>
    %88 = arith.mulf %87, %27 : vector<4x9xf32>
    %89 = arith.addf %85, %88 : vector<4x9xf32>
    %c13 = arith.constant 13 : index
    %90 = memref.load %arg2[%c13] : memref<32xf32, #tpu.memory_space<smem>>
    %91 = vector.broadcast %90 : f32 to vector<4x9xf32>
    %92 = arith.mulf %91, %29 : vector<4x9xf32>
    %93 = arith.addf %89, %92 : vector<4x9xf32>
    %c14 = arith.constant 14 : index
    %94 = memref.load %arg2[%c14] : memref<32xf32, #tpu.memory_space<smem>>
    %95 = vector.broadcast %94 : f32 to vector<4x9xf32>
    %96 = arith.mulf %95, %31 : vector<4x9xf32>
    %97 = arith.addf %93, %96 : vector<4x9xf32>
    %c15 = arith.constant 15 : index
    %98 = memref.load %arg2[%c15] : memref<32xf32, #tpu.memory_space<smem>>
    %99 = vector.broadcast %98 : f32 to vector<4x9xf32>
    %100 = arith.mulf %99, %33 : vector<4x9xf32>
    %101 = arith.addf %97, %100 : vector<4x9xf32>
    %cst_5 = arith.constant 0.000000e+00 : f32
    %102 = vector.broadcast %cst_5 : f32 to vector<4x9xf32>
    %103 = arith.maximumf %101, %102 : vector<4x9xf32>
    %104 = vector.extract_strided_slice %1 {offsets = [0, 0, 7], sizes = [1, 4, 9], strides = [1, 1, 1]} : vector<2x4x16xf32> to vector<1x4x9xf32>
    %105 = vector.shape_cast %104 : vector<1x4x9xf32> to vector<4x9xf32>
    %106 = arith.addf %103, %105 : vector<4x9xf32>
    %cst_6 = arith.constant 0.000000e+00 : f32
    %107 = vector.broadcast %cst_6 : f32 to vector<4x9xf32>
    %c1_7 = arith.constant 1 : index
    %108 = memref.load %arg3[%c1_7] : memref<2xf32, #tpu.memory_space<smem>>
    %109 = vector.broadcast %108 : f32 to vector<4x9xf32>
    %110 = arith.addf %107, %109 : vector<4x9xf32>
    %c16 = arith.constant 16 : index
    %111 = memref.load %arg2[%c16] : memref<32xf32, #tpu.memory_space<smem>>
    %112 = vector.broadcast %111 : f32 to vector<4x9xf32>
    %113 = arith.mulf %112, %3 : vector<4x9xf32>
    %114 = arith.addf %110, %113 : vector<4x9xf32>
    %c17 = arith.constant 17 : index
    %115 = memref.load %arg2[%c17] : memref<32xf32, #tpu.memory_space<smem>>
    %116 = vector.broadcast %115 : f32 to vector<4x9xf32>
    %117 = arith.mulf %116, %5 : vector<4x9xf32>
    %118 = arith.addf %114, %117 : vector<4x9xf32>
    %c18 = arith.constant 18 : index
    %119 = memref.load %arg2[%c18] : memref<32xf32, #tpu.memory_space<smem>>
    %120 = vector.broadcast %119 : f32 to vector<4x9xf32>
    %121 = arith.mulf %120, %7 : vector<4x9xf32>
    %122 = arith.addf %118, %121 : vector<4x9xf32>
    %c19 = arith.constant 19 : index
    %123 = memref.load %arg2[%c19] : memref<32xf32, #tpu.memory_space<smem>>
    %124 = vector.broadcast %123 : f32 to vector<4x9xf32>
    %125 = arith.mulf %124, %9 : vector<4x9xf32>
    %126 = arith.addf %122, %125 : vector<4x9xf32>
    %c20 = arith.constant 20 : index
    %127 = memref.load %arg2[%c20] : memref<32xf32, #tpu.memory_space<smem>>
    %128 = vector.broadcast %127 : f32 to vector<4x9xf32>
    %129 = arith.mulf %128, %11 : vector<4x9xf32>
    %130 = arith.addf %126, %129 : vector<4x9xf32>
    %c21 = arith.constant 21 : index
    %131 = memref.load %arg2[%c21] : memref<32xf32, #tpu.memory_space<smem>>
    %132 = vector.broadcast %131 : f32 to vector<4x9xf32>
    %133 = arith.mulf %132, %13 : vector<4x9xf32>
    %134 = arith.addf %130, %133 : vector<4x9xf32>
    %c22 = arith.constant 22 : index
    %135 = memref.load %arg2[%c22] : memref<32xf32, #tpu.memory_space<smem>>
    %136 = vector.broadcast %135 : f32 to vector<4x9xf32>
    %137 = arith.mulf %136, %15 : vector<4x9xf32>
    %138 = arith.addf %134, %137 : vector<4x9xf32>
    %c23 = arith.constant 23 : index
    %139 = memref.load %arg2[%c23] : memref<32xf32, #tpu.memory_space<smem>>
    %140 = vector.broadcast %139 : f32 to vector<4x9xf32>
    %141 = arith.mulf %140, %17 : vector<4x9xf32>
    %142 = arith.addf %138, %141 : vector<4x9xf32>
    %c24 = arith.constant 24 : index
    %143 = memref.load %arg2[%c24] : memref<32xf32, #tpu.memory_space<smem>>
    %144 = vector.broadcast %143 : f32 to vector<4x9xf32>
    %145 = arith.mulf %144, %19 : vector<4x9xf32>
    %146 = arith.addf %142, %145 : vector<4x9xf32>
    %c25 = arith.constant 25 : index
    %147 = memref.load %arg2[%c25] : memref<32xf32, #tpu.memory_space<smem>>
    %148 = vector.broadcast %147 : f32 to vector<4x9xf32>
    %149 = arith.mulf %148, %21 : vector<4x9xf32>
    %150 = arith.addf %146, %149 : vector<4x9xf32>
    %c26 = arith.constant 26 : index
    %151 = memref.load %arg2[%c26] : memref<32xf32, #tpu.memory_space<smem>>
    %152 = vector.broadcast %151 : f32 to vector<4x9xf32>
    %153 = arith.mulf %152, %23 : vector<4x9xf32>
    %154 = arith.addf %150, %153 : vector<4x9xf32>
    %c27 = arith.constant 27 : index
    %155 = memref.load %arg2[%c27] : memref<32xf32, #tpu.memory_space<smem>>
    %156 = vector.broadcast %155 : f32 to vector<4x9xf32>
    %157 = arith.mulf %156, %25 : vector<4x9xf32>
    %158 = arith.addf %154, %157 : vector<4x9xf32>
    %c28 = arith.constant 28 : index
    %159 = memref.load %arg2[%c28] : memref<32xf32, #tpu.memory_space<smem>>
    %160 = vector.broadcast %159 : f32 to vector<4x9xf32>
    %161 = arith.mulf %160, %27 : vector<4x9xf32>
    %162 = arith.addf %158, %161 : vector<4x9xf32>
    %c29 = arith.constant 29 : index
    %163 = memref.load %arg2[%c29] : memref<32xf32, #tpu.memory_space<smem>>
    %164 = vector.broadcast %163 : f32 to vector<4x9xf32>
    %165 = arith.mulf %164, %29 : vector<4x9xf32>
    %166 = arith.addf %162, %165 : vector<4x9xf32>
    %c30 = arith.constant 30 : index
    %167 = memref.load %arg2[%c30] : memref<32xf32, #tpu.memory_space<smem>>
    %168 = vector.broadcast %167 : f32 to vector<4x9xf32>
    %169 = arith.mulf %168, %31 : vector<4x9xf32>
    %170 = arith.addf %166, %169 : vector<4x9xf32>
    %c31 = arith.constant 31 : index
    %171 = memref.load %arg2[%c31] : memref<32xf32, #tpu.memory_space<smem>>
    %172 = vector.broadcast %171 : f32 to vector<4x9xf32>
    %173 = arith.mulf %172, %33 : vector<4x9xf32>
    %174 = arith.addf %170, %173 : vector<4x9xf32>
    %cst_8 = arith.constant 0.000000e+00 : f32
    %175 = vector.broadcast %cst_8 : f32 to vector<4x9xf32>
    %176 = arith.maximumf %174, %175 : vector<4x9xf32>
    %177 = vector.extract_strided_slice %1 {offsets = [1, 0, 7], sizes = [1, 4, 9], strides = [1, 1, 1]} : vector<2x4x16xf32> to vector<1x4x9xf32>
    %178 = vector.shape_cast %177 : vector<1x4x9xf32> to vector<4x9xf32>
    %179 = arith.addf %176, %178 : vector<4x9xf32>
    %180 = arith.addf %106, %179 : vector<4x9xf32>
    %cst_9 = arith.constant dense<0.000000e+00> : vector<9xf32>
    %181 = vector.multi_reduction <add>, %180, %cst_9 [0] : vector<4x9xf32> to vector<9xf32>
    %182 = vector.shape_cast %181 : vector<9xf32> to vector<1x9xf32>
    %cst_10 = arith.constant 1.250000e-01 : f32
    %183 = vector.broadcast %cst_10 : f32 to vector<1x9xf32>
    %184 = arith.mulf %182, %183 : vector<1x9xf32>
    %185 = vector.broadcast %184 : vector<1x9xf32> to vector<4x9xf32>
    %186 = arith.subf %106, %185 : vector<4x9xf32>
    %187 = vector.broadcast %184 : vector<1x9xf32> to vector<4x9xf32>
    %188 = arith.subf %179, %187 : vector<4x9xf32>
    %189 = arith.mulf %186, %186 : vector<4x9xf32>
    %190 = arith.mulf %188, %188 : vector<4x9xf32>
    %191 = arith.addf %189, %190 : vector<4x9xf32>
    %cst_11 = arith.constant dense<0.000000e+00> : vector<9xf32>
    %192 = vector.multi_reduction <add>, %191, %cst_11 [0] : vector<4x9xf32> to vector<9xf32>
    %193 = vector.shape_cast %192 : vector<9xf32> to vector<1x9xf32>
    %cst_12 = arith.constant 1.250000e-01 : f32
    %194 = vector.broadcast %cst_12 : f32 to vector<1x9xf32>
    %195 = arith.mulf %193, %194 : vector<1x9xf32>
    %cst_13 = arith.constant 9.99999974E-6 : f32
    %196 = vector.broadcast %cst_13 : f32 to vector<1x9xf32>
    %197 = arith.addf %195, %196 : vector<1x9xf32>
    %198 = math.rsqrt %197 : vector<1x9xf32>
    %199 = vector.broadcast %198 : vector<1x9xf32> to vector<4x9xf32>
    %200 = arith.mulf %186, %199 : vector<4x9xf32>
    %c0_14 = arith.constant 0 : index
    %c0_15 = arith.constant 0 : index
    %c0_16 = arith.constant 0 : index
    %201 = vector.load %arg4[%c0_14, %c0_15, %c0_16] : memref<2x4x1xf32, #tpu.memory_space<vmem>>, vector<1x4x1xf32>
    %202 = vector.shape_cast %201 : vector<1x4x1xf32> to vector<4x1xf32>
    %203 = vector.broadcast %202 : vector<4x1xf32> to vector<4x9xf32>
    %204 = arith.mulf %200, %203 : vector<4x9xf32>
    %c0_17 = arith.constant 0 : index
    %c0_18 = arith.constant 0 : index
    %c0_19 = arith.constant 0 : index
    %205 = vector.load %arg5[%c0_17, %c0_18, %c0_19] : memref<2x4x1xf32, #tpu.memory_space<vmem>>, vector<1x4x1xf32>
    %206 = vector.shape_cast %205 : vector<1x4x1xf32> to vector<4x1xf32>
    %207 = vector.broadcast %206 : vector<4x1xf32> to vector<4x9xf32>
    %208 = arith.addf %204, %207 : vector<4x9xf32>
    %c0_20 = arith.constant 0 : index
    %c0_21 = arith.constant 0 : index
    %c0_22 = arith.constant 0 : index
    %c0_23 = arith.constant 0 : index
    %209 = vector.load %arg6[%c0_20, %c0_21, %c0_22, %c0_23] : memref<1x2x4x9xf32, #tpu.memory_space<vmem>>, vector<1x1x4x9xf32>
    %210 = vector.shape_cast %209 : vector<1x1x4x9xf32> to vector<4x9xf32>
    %211 = vector.shape_cast %208 : vector<4x9xf32> to vector<1x1x4x9xf32>
    tpu.vector_store %arg6[%c0_20, %c0_21, %c0_22, %c0_23], %211 {strides = array<i32>} : memref<1x2x4x9xf32, #tpu.memory_space<vmem>>, vector<1x1x4x9xf32>,
    %212 = vector.broadcast %198 : vector<1x9xf32> to vector<4x9xf32>
    %213 = arith.mulf %188, %212 : vector<4x9xf32>
    %c1_24 = arith.constant 1 : index
    %c0_25 = arith.constant 0 : index
    %c0_26 = arith.constant 0 : index
    %214 = vector.load %arg4[%c1_24, %c0_25, %c0_26] : memref<2x4x1xf32, #tpu.memory_space<vmem>>, vector<1x4x1xf32>
    %215 = vector.shape_cast %214 : vector<1x4x1xf32> to vector<4x1xf32>
    %216 = vector.broadcast %215 : vector<4x1xf32> to vector<4x9xf32>
    %217 = arith.mulf %213, %216 : vector<4x9xf32>
    %c1_27 = arith.constant 1 : index
    %c0_28 = arith.constant 0 : index
    %c0_29 = arith.constant 0 : index
    %218 = vector.load %arg5[%c1_27, %c0_28, %c0_29] : memref<2x4x1xf32, #tpu.memory_space<vmem>>, vector<1x4x1xf32>
    %219 = vector.shape_cast %218 : vector<1x4x1xf32> to vector<4x1xf32>
    %220 = vector.broadcast %219 : vector<4x1xf32> to vector<4x9xf32>
    %221 = arith.addf %217, %220 : vector<4x9xf32>
    %c0_30 = arith.constant 0 : index
    %c1_31 = arith.constant 1 : index
    %c0_32 = arith.constant 0 : index
    %c0_33 = arith.constant 0 : index
    %222 = vector.load %arg6[%c0_30, %c1_31, %c0_32, %c0_33] : memref<1x2x4x9xf32, #tpu.memory_space<vmem>>, vector<1x1x4x9xf32>
    %223 = vector.shape_cast %222 : vector<1x1x4x9xf32> to vector<4x9xf32>
    %224 = vector.shape_cast %221 : vector<4x9xf32> to vector<1x1x4x9xf32>
    tpu.vector_store %arg6[%c0_30, %c1_31, %c0_32, %c0_33], %224 {strides = array<i32>} : memref<1x2x4x9xf32, #tpu.memory_space<vmem>>, vector<1x1x4x9xf32>,
    return
  }
  func.func @transform_0(%arg0: i32) -> (i32, i32, i32, i32) {
    %c0_i32 = arith.constant 0 : i32
    %c0_i32_0 = arith.constant 0 : i32
    %c0_i32_1 = arith.constant 0 : i32
    %c0_i32_2 = arith.constant 0 : i32
    return %arg0, %c0_i32, %c0_i32_0, %c0_i32_1 : i32, i32, i32, i32
  }
  func.func @transform_1(%arg0: i32) -> i32 {
    %c0_i32 = arith.constant 0 : i32
    %c0_i32_0 = arith.constant 0 : i32
    return %c0_i32 : i32
  }
  func.func @transform_2(%arg0: i32) -> i32 {
    %c0_i32 = arith.constant 0 : i32
    %c0_i32_0 = arith.constant 0 : i32
    return %c0_i32 : i32
  }
  func.func @transform_3(%arg0: i32) -> (i32, i32, i32) {
    %c0_i32 = arith.constant 0 : i32
    %c0_i32_0 = arith.constant 0 : i32
    %c0_i32_1 = arith.constant 0 : i32
    %c0_i32_2 = arith.constant 0 : i32
    return %c0_i32, %c0_i32_0, %c0_i32_1 : i32, i32, i32
  }
  func.func @transform_4(%arg0: i32) -> (i32, i32, i32) {
    %c0_i32 = arith.constant 0 : i32
    %c0_i32_0 = arith.constant 0 : i32
    %c0_i32_1 = arith.constant 0 : i32
    %c0_i32_2 = arith.constant 0 : i32
    return %c0_i32, %c0_i32_0, %c0_i32_1 : i32, i32, i32
  }
  func.func @transform_5(%arg0: i32) -> (i32, i32, i32, i32) {
    %c0_i32 = arith.constant 0 : i32
    %c0_i32_0 = arith.constant 0 : i32
    %c0_i32_1 = arith.constant 0 : i32
    %c0_i32_2 = arith.constant 0 : i32
    return %arg0, %c0_i32, %c0_i32_0, %c0_i32_1 : i32, i32, i32, i32
  }
}

</mosaic_0001>

<llo_original>
// kernel: multi_scale_tds_conv2d_block.1
$region0: #{multi_scale_tds_conv2d_block.1}
  #allocation0 [shape = 'u32[]', space=smem, size = 0x4, offset = 0x4, fixed_abs, tag = 'smem constant byte address 0x4 - core index']
  #allocation1 [shape = 'u32[144,128]{1,0:T(1,128)}', space=vmem, size = 0x12000, scoped, tag = 'internal scratch']
  %s0 = inlined_call_operand.vmem [shape: f32[2,2,4,16], index: 0, kind: input, shape index: {}]
  %s1 = inlined_call_operand.vmem [shape: f32[32], index: 1, kind: input, shape index: {}]
  %s2 = inlined_call_operand.vmem [shape: f32[2], index: 2, kind: input, shape index: {}]
  %s3 = inlined_call_operand.vmem [shape: f32[2,4,1], index: 3, kind: input, shape index: {}]
  %s4 = inlined_call_operand.vmem [shape: f32[2,4,1], index: 4, kind: input, shape index: {}]
  %s5 = inlined_call_operand.hbm [shape: f32[2,2,4,9], index: 5, kind: output, shape index: {}]
  %s6 = sld [smem:[#allocation0]]
  $region61: #{multi_scale_tds_conv2d_block.1} parent=0
    _
  %s8 = ssub.s32 1, %s6
  %s9 = scalar_select 0, %s8, %s6
  $region1: #{multi_scale_tds_conv2d_block.1} parent=0
    #allocation2 [shape = 'u8[512]{0}', space=smem, size = 0x200, scoped, tag = 'input window, operand 1, single buffered']
    #allocation3 [shape = 's32[2]{0}', space=sflag, size = 0x8, scoped, tag = 'scoped memory for multi_scale_tds_conv2d_block.1']
    #allocation4 [shape = 's32[2]{0}', space=sflag, size = 0x8, scoped, tag = 'scoped memory for multi_scale_tds_conv2d_block.1']
    #allocation5 [shape = 'u8[512]{0}', space=smem, size = 0x200, scoped, tag = 'input window, operand 2, single buffered']
    #allocation6 [shape = 's32[1]{0}', space=sflag, size = 0x4, scoped, tag = 'scoped memory for multi_scale_tds_conv2d_block.1']
    #allocation7 [shape = 'u8[8192]{0}', space=vmem, size = 0x2000, scoped, tag = 'output window, operand 0']
    %10 = vsyncpa [#allocation4], 0
    %11 = vsyncpa [#allocation6], 0
    %12 = vsyncpa [#allocation3], 0
    %s13 = scalar_lea.sflag [#allocation3], 1
    %14 = vsyncpa %s13, 0
    loop: start=0, step=1, limit=4
    $region2: #{multi_scale_tds_conv2d_block.1} parent=1 // loop_pre_header
      _
    $region3: #{multi_scale_tds_conv2d_block.1} parent=1 // loop_header
      %s16 = sphi 0, %s20
      %p17 = scmp.ge.s32.totalorder %s16, 4
      %s26 = sphi 0, %s28
      %s29 = sphi 0, %s26
      %s30 = sphi 0, %s29
      %s46 = sphi 0, %s30
      %s50 = sphi 0, %s50
      %s52 = sphi 0, %s50
      %s53 = sphi 0, %s52
      %s67 = sphi 0, %s53
      %s71 = sphi 0, %s71
      %s73 = sphi 0, %s71
      %s74 = sphi 0, %s73
      %s88 = sphi 0, %s74
      %s92 = sphi 0, %s92
      %s94 = sphi 0, %s92
      %s95 = sphi 0, %s94
      %s109 = sphi 0, %s95
      %s113 = sphi 0, %s113
      %s115 = sphi 0, %s113
      %s116 = sphi 0, %s115
      %s130 = sphi 0, %s116
      %s136 = sphi 0, %s138
      %s139 = sphi 0, %s136
      %s140 = sphi 0, %s139
      %s156 = sphi 0, %s140
    $region4: #{multi_scale_tds_conv2d_block.1} parent=1 // loop_header_branch
      %19 = sbr.rel (%p17) target = $region8
    $region5: #{multi_scale_tds_conv2d_block.1} parent=1 // loop_body
      %s21 = ssub.s32 %s16, 1
      %s22 = ssub.s32 %s16, 2
      %s23 = sadd.s32 %s16, 1
      %s24 = ssub.s32 %s16, %s23
      %p25 = scmp.eq.s32.totalorder %s24, 0
      %s27 = sadd.s32 %s26, 1
      %s28 = scalar_select %p25, %s26, %s27
      %p31 = pneg %p25
      %p32 = scmp.eq.s32.totalorder %s16, 1
      %p33 = por %p31, %p32
      %p34 = scmp.ne.s32.totalorder %s26, %s29
      %p35 = scmp.eq.s32.totalorder %s16, 0
      %p36 = por %p34, %p35
      %p37 = scmp.ne.s32.totalorder %s26, %s29
      %p38 = scmp.eq.s32.totalorder %s21, 1
      %p39 = por %p37, %p38
      %p40 = scmp.ne.s32.totalorder %s29, %s30
      %p41 = scmp.eq.s32.totalorder %s21, 0
      %p42 = por %p40, %p41
      %p43 = scmp.ne.s32.totalorder %s29, %s30
      %p44 = scmp.eq.s32.totalorder %s22, 1
      %p45 = por %p43, %p44
      %p47 = scmp.ne.s32.totalorder %s30, %s46
      %p48 = scmp.eq.s32.totalorder %s22, 0
      %p49 = por %p47, %p48
      %s51 = sadd.s32 %s50, 1
      %p54 = scmp.eq.s32.totalorder %s16, 1
      %p55 = scmp.ne.s32.totalorder %s50, %s52
      %p56 = scmp.eq.s32.totalorder %s16, 0
      %p57 = por %p55, %p56
      %p58 = scmp.ne.s32.totalorder %s50, %s52
      %p59 = scmp.eq.s32.totalorder %s21, 1
      %p60 = por %p58, %p59
      %p61 = scmp.ne.s32.totalorder %s52, %s53
      %p62 = scmp.eq.s32.totalorder %s21, 0
      %p63 = por %p61, %p62
      %p64 = scmp.ne.s32.totalorder %s52, %s53
      %p65 = scmp.eq.s32.totalorder %s22, 1
      %p66 = por %p64, %p65
      %p68 = scmp.ne.s32.totalorder %s53, %s67
      %p69 = scmp.eq.s32.totalorder %s22, 0
      %p70 = por %p68, %p69
      %s72 = sadd.s32 %s71, 1
      %p75 = scmp.eq.s32.totalorder %s16, 1
      %p76 = scmp.ne.s32.totalorder %s71, %s73
      %p77 = scmp.eq.s32.totalorder %s16, 0
      %p78 = por %p76, %p77
      %p79 = scmp.ne.s32.totalorder %s71, %s73
      %p80 = scmp.eq.s32.totalorder %s21, 1
      %p81 = por %p79, %p80
      %p82 = scmp.ne.s32.totalorder %s73, %s74
      %p83 = scmp.eq.s32.totalorder %s21, 0
      %p84 = por %p82, %p83
      %p85 = scmp.ne.s32.totalorder %s73, %s74
      %p86 = scmp.eq.s32.totalorder %s22, 1
      %p87 = por %p85, %p86
      %p89 = scmp.ne.s32.totalorder %s74, %s88
      %p90 = scmp.eq.s32.totalorder %s22, 0
      %p91 = por %p89, %p90
      %s93 = sadd.s32 %s92, 1
      %p96 = scmp.eq.s32.totalorder %s16, 1
      %p97 = scmp.ne.s32.totalorder %s92, %s94
      %p98 = scmp.eq.s32.totalorder %s16, 0
      %p99 = por %p97, %p98
      %p100 = scmp.ne.s32.totalorder %s92, %s94
      %p101 = scmp.eq.s32.totalorder %s21, 1
      %p102 = por %p100, %p101
      %p103 = scmp.ne.s32.totalorder %s94, %s95
      %p104 = scmp.eq.s32.totalorder %s21, 0
      %p105 = por %p103, %p104
      %p106 = scmp.ne.s32.totalorder %s94, %s95
      %p107 = scmp.eq.s32.totalorder %s22, 1
      %p108 = por %p106, %p107
      %p110 = scmp.ne.s32.totalorder %s95, %s109
      %p111 = scmp.eq.s32.totalorder %s22, 0
      %p112 = por %p110, %p111
      %s114 = sadd.s32 %s113, 1
      %p117 = scmp.eq.s32.totalorder %s16, 1
      %p118 = scmp.ne.s32.totalorder %s113, %s115
      %p119 = scmp.eq.s32.totalorder %s16, 0
      %p120 = por %p118, %p119
      %p121 = scmp.ne.s32.totalorder %s113, %s115
      %p122 = scmp.eq.s32.totalorder %s21, 1
      %p123 = por %p121, %p122
      %p124 = scmp.ne.s32.totalorder %s115, %s116
      %p125 = scmp.eq.s32.totalorder %s21, 0
      %p126 = por %p124, %p125
      %p127 = scmp.ne.s32.totalorder %s115, %s116
      %p128 = scmp.eq.s32.totalorder %s22, 1
      %p129 = por %p127, %p128
      %p131 = scmp.ne.s32.totalorder %s116, %s130
      %p132 = scmp.eq.s32.totalorder %s22, 0
      %p133 = por %p131, %p132
      %s134 = ssub.s32 %s16, %s23
      %p135 = scmp.eq.s32.totalorder %s134, 0
      %s137 = sadd.s32 %s136, 1
      %s138 = scalar_select %p135, %s136, %s137
      %p141 = pneg %p135
      %p142 = scmp.eq.s32.totalorder %s16, 1
      %p143 = por %p141, %p142
      %p144 = scmp.ne.s32.totalorder %s136, %s139
      %p145 = scmp.eq.s32.totalorder %s16, 0
      %p146 = por %p144, %p145
      %p147 = scmp.ne.s32.totalorder %s136, %s139
      %p148 = scmp.eq.s32.totalorder %s21, 1
      %p149 = por %p147, %p148
      %p150 = scmp.ne.s32.totalorder %s139, %s140
      %p151 = scmp.eq.s32.totalorder %s21, 0
      %p152 = por %p150, %p151
      %p153 = scmp.ne.s32.totalorder %s139, %s140
      %p154 = scmp.eq.s32.totalorder %s22, 1
      %p155 = por %p153, %p154
      %p157 = scmp.ne.s32.totalorder %s140, %s156
      %p158 = scmp.eq.s32.totalorder %s22, 0
      %p159 = por %p157, %p158
      %p160 = scmp.le.s32.totalorder 1, %s16
      %p161 = scmp.lt.s32.totalorder %s16, 3
      %p162 = pnand %p160, %p161
      %p163 = pneg %p162
      // Predicated region
      $region9: #{multi_scale_tds_conv2d_block.1} parent=5 // pred_check
        _
      $region10: #{multi_scale_tds_conv2d_block.1} parent=5 // pred_check_branch
        %165 = sbr.rel (%p162) target = $region12
      $region11: #{multi_scale_tds_conv2d_block.1} parent=5 // pred_region
        %s166 = ssub.s32 %s16, 1
        // Predicated region
        $region13: #{multi_scale_tds_conv2d_block.1} parent=11 // pred_check
          %p167 = pneg %p63
        $region14: #{multi_scale_tds_conv2d_block.1} parent=11 // pred_check_branch
          %169 = sbr.rel (%p167) target = $region16
        $region15: #{multi_scale_tds_conv2d_block.1} parent=11 // pred_region
          %s171 = ssub.s32 16, 16
          %172 = vsyncadd [#allocation4], %s171
          %s174 = sshll.u32 %s1, 4
          %s175 = int_to_ptr.vmem [resolvable:$true] %s174
          %177 = dma.vmem_to_smem %s175, 16, [#allocation2], [#allocation4]
        $region16: #{multi_scale_tds_conv2d_block.1} parent=11 // pred_fallthru
          _
        // Predicated region
        $region17: #{multi_scale_tds_conv2d_block.1} parent=11 // pred_check
          %p178 = pneg %p84
        $region18: #{multi_scale_tds_conv2d_block.1} parent=11 // pred_check_branch
          %180 = sbr.rel (%p178) target = $region20
        $region19: #{multi_scale_tds_conv2d_block.1} parent=11 // pred_region
          %s182 = ssub.s32 16, 16
          %183 = vsyncadd [#allocation6], %s182
          %s185 = sshll.u32 %s2, 4
          %s186 = int_to_ptr.vmem [resolvable:$true] %s185
          %188 = dma.vmem_to_smem %s186, 16, [#allocation5], [#allocation6]
        $region20: #{multi_scale_tds_conv2d_block.1} parent=11 // pred_fallthru
          _
        // Predicated region
        $region21: #{multi_scale_tds_conv2d_block.1} parent=11 // pred_check
          %p189 = pneg %p105
        $region22: #{multi_scale_tds_conv2d_block.1} parent=11 // pred_check_branch
          %191 = sbr.rel (%p189) target = $region24
        $region23: #{multi_scale_tds_conv2d_block.1} parent=11 // pred_region
          _
        $region24: #{multi_scale_tds_conv2d_block.1} parent=11 // pred_fallthru
          _
        // Predicated region
        $region25: #{multi_scale_tds_conv2d_block.1} parent=11 // pred_check
          %p192 = pneg %p126
        $region26: #{multi_scale_tds_conv2d_block.1} parent=11 // pred_check_branch
          %194 = sbr.rel (%p192) target = $region28
        $region27: #{multi_scale_tds_conv2d_block.1} parent=11 // pred_region
          _
        $region28: #{multi_scale_tds_conv2d_block.1} parent=11 // pred_fallthru
          _
      $region12: #{multi_scale_tds_conv2d_block.1} parent=5 // pred_fallthru
        _
      %p195 = scmp.lt.s32.totalorder %s16, 2
      // Predicated region
      $region29: #{multi_scale_tds_conv2d_block.1} parent=5 // pred_check
        %p196 = pneg %p195
      $region30: #{multi_scale_tds_conv2d_block.1} parent=5 // pred_check_branch
        %198 = sbr.rel (%p196) target = $region32
      $region31: #{multi_scale_tds_conv2d_block.1} parent=5 // pred_region
        // Predicated region
        $region33: #{multi_scale_tds_conv2d_block.1} parent=31 // pred_check
          %p199 = pneg %p36
        $region34: #{multi_scale_tds_conv2d_block.1} parent=31 // pred_check_branch
          %201 = sbr.rel (%p199) target = $region36
        $region35: #{multi_scale_tds_conv2d_block.1} parent=31 // pred_region
          %p202 = scmp.lt.s32.totalorder %s16, 1
          %s203 = scalar_select %p202, %s16, 1
          %s204 = smul.addr %s203, 2
          %s205 = smul.addr %s204, 4
          %s206 = scalar_lea.vmem %s0, %s205
        $region36: #{multi_scale_tds_conv2d_block.1} parent=31 // pred_fallthru
          _
      $region32: #{multi_scale_tds_conv2d_block.1} parent=5 // pred_fallthru
        _
      %p207 = scmp.le.s32.totalorder 1, %s16
      %p208 = scmp.lt.s32.totalorder %s16, 3
      %p209 = pnand %p207, %p208
      %p210 = pneg %p209
      // Predicated region
      $region37: #{multi_scale_tds_conv2d_block.1} parent=5 // pred_check
        _
      $region38: #{multi_scale_tds_conv2d_block.1} parent=5 // pred_check_branch
        %212 = sbr.rel (%p209) target = $region40
      $region39: #{multi_scale_tds_conv2d_block.1} parent=5 // pred_region
        %s213 = ssub.s32 %s16, 1
        // Predicated region
        $region41: #{multi_scale_tds_conv2d_block.1} parent=39 // pred_check
          %p214 = pneg %p63
        $region42: #{multi_scale_tds_conv2d_block.1} parent=39 // pred_check_branch
          %216 = sbr.rel (%p214) target = $region44
        $region43: #{multi_scale_tds_conv2d_block.1} parent=39 // pred_region
          %217 = dma.done [#allocation4], 16
        $region44: #{multi_scale_tds_conv2d_block.1} parent=39 // pred_fallthru
          _
        // Predicated region
        $region45: #{multi_scale_tds_conv2d_block.1} parent=39 // pred_check
          %p218 = pneg %p84
        $region46: #{multi_scale_tds_conv2d_block.1} parent=39 // pred_check_branch
          %220 = sbr.rel (%p218) target = $region48
        $region47: #{multi_scale_tds_conv2d_block.1} parent=39 // pred_region
          %221 = dma.done [#allocation6], 16
        $region48: #{multi_scale_tds_conv2d_block.1} parent=39 // pred_fallthru
          _
        %222 = sfence
        %p223 = scmp.lt.s32.totalorder %s21, 1
        %s224 = scalar_select %p223, %s21, 1
        %s225 = smul.addr %s224, 2
        %s226 = smul.addr %s225, 4
        %s227 = scalar_lea.vmem %s0, %s226
        %p228 = pneg %p42
        %p229 = pneg %p39
        %p230 = pneg %p63
        %p231 = pneg %p60
        %p232 = pneg %p84
        %p233 = pneg %p81
        %p234 = pneg %p105
        %p235 = pneg %p102
        %p236 = pneg %p126
        %p237 = pneg %p123
        %p238 = pneg %p152
        %p239 = pneg %p149
        %s240 = sand.u32 %s139, 1
        %s241 = scalar_lea.sflag [#allocation3], %s240
        %s242 = sand.u32 %s139, 1
        %s243 = smul.addr %s242, 8
        %s244 = scalar_lea.vmem [#allocation7], %s243
        %p245 = scmp.lt.s32.totalorder %s21, 1
        %s246 = scalar_select %p245, %s21, 1
        %s247 = smul.addr %s246, 2
        %s248 = smul.addr %s247, 4
        %s249 = scalar_lea.vmem %s0, %s248
        %v250 = vld [vmem:[%s249] sm:$0xf]
        %v251 = vld [vmem:[%s249 + $0x4] sm:$0xf]
        %s252 = sld [smem:[#allocation5]]
        %v253 = vstv %s252
        %v254 = vadd.f32 %v253, 0.0
        %s255 = sld [smem:[#allocation2]]
        %v256 = vstv %s255
        %v257 = vmul.f32 %v256, %v250
        %v258 = vadd.f32 %v254, %v257
        %s259 = sld [smem:[#allocation2 + $0x1]]
        %v260 = vstv %s259
        %v261 = vmul.f32 %v260, %v250
        %263 = vrot.lane.b32.xlu0 %v261, 127
        %v264 = vpop.permute.xlu0 %263
        %v266 = vadd.f32 %v258, %v264
        %s267 = sld [smem:[#allocation2 + $0x2]]
        %v268 = vstv %s267
        %v269 = vmul.f32 %v268, %v250
        %271 = vrot.lane.b32.xlu0 %v269, 126
        %v272 = vpop.permute.xlu0 %271
        %v274 = vadd.f32 %v266, %v272
        %s275 = sld [smem:[#allocation2 + $0x3]]
        %v276 = vstv %s275
        %v277 = vmul.f32 %v276, %v250
        %279 = vrot.lane.b32.xlu0 %v277, 125
        %v280 = vpop.permute.xlu0 %279
        %v282 = vadd.f32 %v274, %v280
        %s283 = sld [smem:[#allocation2 + $0x4]]
        %v284 = vstv %s283
        %v285 = vmul.f32 %v284, %v250
        %287 = vrot.lane.b32.xlu0 %v285, 124
        %v288 = vpop.permute.xlu0 %287
        %v290 = vadd.f32 %v282, %v288
        %s291 = sld [smem:[#allocation2 + $0x5]]
        %v292 = vstv %s291
        %v293 = vmul.f32 %v292, %v250
        %295 = vrot.lane.b32.xlu0 %v293, 123
        %v296 = vpop.permute.xlu0 %295
        %v298 = vadd.f32 %v290, %v296
        %s299 = sld [smem:[#allocation2 + $0x6]]
        %v300 = vstv %s299
        %v301 = vmul.f32 %v300, %v250
        %303 = vrot.lane.b32.xlu0 %v301, 122
        %v304 = vpop.permute.xlu0 %303
        %v306 = vadd.f32 %v298, %v304
        %s307 = sld [smem:[#allocation2 + $0x7]]
        %v308 = vstv %s307
        %v309 = vmul.f32 %v308, %v250
        %311 = vrot.lane.b32.xlu0 %v309, 121
        %v312 = vpop.permute.xlu0 %311
        %v314 = vadd.f32 %v306, %v312
        %s315 = sld [smem:[#allocation2 + $0x8]]
        %v316 = vstv %s315
        %v317 = vmul.f32 %v316, %v251
        %v318 = vadd.f32 %v314, %v317
        %s319 = sld [smem:[#allocation2 + $0x9]]
        %v320 = vstv %s319
        %v321 = vmul.f32 %v320, %v251
        %323 = vrot.lane.b32.xlu0 %v321, 127
        %v324 = vpop.permute.xlu0 %323
        %v326 = vadd.f32 %v318, %v324
        %s327 = sld [smem:[#allocation2 + $0xa]]
        %v328 = vstv %s327
        %v329 = vmul.f32 %v328, %v251
        %331 = vrot.lane.b32.xlu0 %v329, 126
        %v332 = vpop.permute.xlu0 %331
        %v334 = vadd.f32 %v326, %v332
        %s335 = sld [smem:[#allocation2 + $0xb]]
        %v336 = vstv %s335
        %v337 = vmul.f32 %v336, %v251
        %339 = vrot.lane.b32.xlu0 %v337, 125
        %v340 = vpop.permute.xlu0 %339
        %v342 = vadd.f32 %v334, %v340
        %s343 = sld [smem:[#allocation2 + $0xc]]
        %v344 = vstv %s343
        %v345 = vmul.f32 %v344, %v251
        %347 = vrot.lane.b32.xlu0 %v345, 124
        %v348 = vpop.permute.xlu0 %347
        %v350 = vadd.f32 %v342, %v348
        %s351 = sld [smem:[#allocation2 + $0xd]]
        %v352 = vstv %s351
        %v353 = vmul.f32 %v352, %v251
        %355 = vrot.lane.b32.xlu0 %v353, 123
        %v356 = vpop.permute.xlu0 %355
        %v358 = vadd.f32 %v350, %v356
        %s359 = sld [smem:[#allocation2 + $0xe]]
        %v360 = vstv %s359
        %v361 = vmul.f32 %v360, %v251
        %363 = vrot.lane.b32.xlu0 %v361, 122
        %v364 = vpop.permute.xlu0 %363
        %v366 = vadd.f32 %v358, %v364
        %s367 = sld [smem:[#allocation2 + $0xf]]
        %v368 = vstv %s367
        %v369 = vmul.f32 %v368, %v251
        %371 = vrot.lane.b32.xlu0 %v369, 121
        %v372 = vpop.permute.xlu0 %371
        %v374 = vadd.f32 %v366, %v372
        %v375 = vmax.f32 %v374, 0.0
        %377 = vrot.lane.b32.xlu0 %v250, 121
        %v378 = vpop.permute.xlu0 %377
        %v380 = vadd.f32 %v375, %v378
        %s381 = sld [smem:[#allocation5 + $0x1]]
        %v382 = vstv %s381
        %v383 = vadd.f32 %v382, 0.0
        %s384 = sld [smem:[#allocation2 + $0x10]]
        %v385 = vstv %s384
        %v386 = vmul.f32 %v385, %v250
        %v387 = vadd.f32 %v383, %v386
        %s388 = sld [smem:[#allocation2 + $0x11]]
        %v389 = vstv %s388
        %v390 = vmul.f32 %v389, %v250
        %392 = vrot.lane.b32.xlu0 %v390, 127
        %v393 = vpop.permute.xlu0 %392
        %v395 = vadd.f32 %v387, %v393
        %s396 = sld [smem:[#allocation2 + $0x12]]
        %v397 = vstv %s396
        %v398 = vmul.f32 %v397, %v250
        %400 = vrot.lane.b32.xlu0 %v398, 126
        %v401 = vpop.permute.xlu0 %400
        %v403 = vadd.f32 %v395, %v401
        %s404 = sld [smem:[#allocation2 + $0x13]]
        %v405 = vstv %s404
        %v406 = vmul.f32 %v405, %v250
        %408 = vrot.lane.b32.xlu0 %v406, 125
        %v409 = vpop.permute.xlu0 %408
        %v411 = vadd.f32 %v403, %v409
        %s412 = sld [smem:[#allocation2 + $0x14]]
        %v413 = vstv %s412
        %v414 = vmul.f32 %v413, %v250
        %416 = vrot.lane.b32.xlu0 %v414, 124
        %v417 = vpop.permute.xlu0 %416
        %v419 = vadd.f32 %v411, %v417
        %s420 = sld [smem:[#allocation2 + $0x15]]
        %v421 = vstv %s420
        %v422 = vmul.f32 %v421, %v250
        %424 = vrot.lane.b32.xlu0 %v422, 123
        %v425 = vpop.permute.xlu0 %424
        %v427 = vadd.f32 %v419, %v425
        %s428 = sld [smem:[#allocation2 + $0x16]]
        %v429 = vstv %s428
        %v430 = vmul.f32 %v429, %v250
        %432 = vrot.lane.b32.xlu0 %v430, 122
        %v433 = vpop.permute.xlu0 %432
        %v435 = vadd.f32 %v427, %v433
        %s436 = sld [smem:[#allocation2 + $0x17]]
        %v437 = vstv %s436
        %v438 = vmul.f32 %v437, %v250
        %440 = vrot.lane.b32.xlu0 %v438, 121
        %v441 = vpop.permute.xlu0 %440
        %v443 = vadd.f32 %v435, %v441
        %s444 = sld [smem:[#allocation2 + $0x18]]
        %v445 = vstv %s444
        %v446 = vmul.f32 %v445, %v251
        %v447 = vadd.f32 %v443, %v446
        %s448 = sld [smem:[#allocation2 + $0x19]]
        %v449 = vstv %s448
        %v450 = vmul.f32 %v449, %v251
        %452 = vrot.lane.b32.xlu0 %v450, 127
        %v453 = vpop.permute.xlu0 %452
        %v455 = vadd.f32 %v447, %v453
        %s456 = sld [smem:[#allocation2 + $0x1a]]
        %v457 = vstv %s456
        %v458 = vmul.f32 %v457, %v251
        %460 = vrot.lane.b32.xlu0 %v458, 126
        %v461 = vpop.permute.xlu0 %460
        %v463 = vadd.f32 %v455, %v461
        %s464 = sld [smem:[#allocation2 + $0x1b]]
        %v465 = vstv %s464
        %v466 = vmul.f32 %v465, %v251
        %468 = vrot.lane.b32.xlu0 %v466, 125
        %v469 = vpop.permute.xlu0 %468
        %v471 = vadd.f32 %v463, %v469
        %s472 = sld [smem:[#allocation2 + $0x1c]]
        %v473 = vstv %s472
        %v474 = vmul.f32 %v473, %v251
        %476 = vrot.lane.b32.xlu0 %v474, 124
        %v477 = vpop.permute.xlu0 %476
        %v479 = vadd.f32 %v471, %v477
        %s480 = sld [smem:[#allocation2 + $0x1d]]
        %v481 = vstv %s480
        %v482 = vmul.f32 %v481, %v251
        %484 = vrot.lane.b32.xlu0 %v482, 123
        %v485 = vpop.permute.xlu0 %484
        %v487 = vadd.f32 %v479, %v485
        %s488 = sld [smem:[#allocation2 + $0x1e]]
        %v489 = vstv %s488
        %v490 = vmul.f32 %v489, %v251
        %492 = vrot.lane.b32.xlu0 %v490, 122
        %v493 = vpop.permute.xlu0 %492
        %v495 = vadd.f32 %v487, %v493
        %s496 = sld [smem:[#allocation2 + $0x1f]]
        %v497 = vstv %s496
        %v498 = vmul.f32 %v497, %v251
        %500 = vrot.lane.b32.xlu0 %v498, 121
        %v501 = vpop.permute.xlu0 %500
        %v503 = vadd.f32 %v495, %v501
        %v504 = vmax.f32 %v503, 0.0
        %506 = vrot.lane.b32.xlu0 %v251, 121
        %v507 = vpop.permute.xlu0 %506
        %v509 = vadd.f32 %v504, %v507
        %v510 = vadd.f32 %v380, %v509
        %vm511 = vcmask 68608
        %v512 = vsel %vm511, %v510, 0.0
        %v513 = vrot.slane %v512, 4
        %v514 = vadd.f32 %v512, %v513
        %v515 = vrot.slane %v514, 2
        %v516 = vadd.f32 %v514, %v515
        %v517 = vrot.slane %v516, 1
        %v518 = vadd.f32 %v516, %v517
        %v519 = vmul.f32 %v518, 0.125
        %v520 = vsub.f32 %v380, %v519
        %v521 = vsub.f32 %v509, %v519
        %v522 = vmul.f32 %v520, %v520
        %v523 = vmul.f32 %v521, %v521
        %v524 = vadd.f32 %v522, %v523
        %v525 = vsel %vm511, %v524, 0.0
        %v526 = vrot.slane %v525, 4
        %v527 = vadd.f32 %v525, %v526
        %v528 = vrot.slane %v527, 2
        %v529 = vadd.f32 %v527, %v528
        %v530 = vrot.slane %v529, 1
        %v531 = vadd.f32 %v529, %v530
        %v532 = vmul.f32 %v531, 0.125
        %v533 = vadd.f32 %v532, 1e-05
        %v534 = vrsqrt.pop %v533
        %v535 = vmul.f32 %v520, %v534
        %v536 = vld [vmem:[%s3] sm:$0xf]
        %538 = vset.pattern.permute.xlu0 0
        %539 = vperm.xlu0 %538, %v536
        %v540 = vpop.permute.xlu0 %539
        %v542 = vmul.f32 %v535, %v540
        %v543 = vld [vmem:[%s4] sm:$0xf]
        %545 = vset.pattern.permute.xlu0 0
        %546 = vperm.xlu0 %545, %v543
        %v547 = vpop.permute.xlu0 %546
        %v549 = vadd.f32 %v542, %v547
        %550 = vst.msk [vmem:[%s244] sm:$0xf] %vm511, %v549
        %v551 = vmul.f32 %v521, %v534
        %s552 = scalar_lea.vmem %s3, 4
        %v553 = vld [vmem:[%s552] sm:$0xf]
        %555 = vset.pattern.permute.xlu0 0
        %556 = vperm.xlu0 %555, %v553
        %v557 = vpop.permute.xlu0 %556
        %v559 = vmul.f32 %v551, %v557
        %s560 = scalar_lea.vmem %s4, 4
        %v561 = vld [vmem:[%s560] sm:$0xf]
        %563 = vset.pattern.permute.xlu0 0
        %564 = vperm.xlu0 %563, %v561
        %v565 = vpop.permute.xlu0 %564
        %v567 = vadd.f32 %v559, %v565
        %s568 = scalar_lea.vmem %s244, 4 [#allocation7]
        %569 = vst.msk [vmem:[%s568] sm:$0xf] %vm511, %v567
        %s570 = sand.u32 %s139, 1
        %s571 = scalar_lea.sflag [#allocation3], %s570
        %s572 = sand.u32 %s139, 1
        %s573 = smul.addr %s572, 8
        %s574 = scalar_lea.vmem [#allocation7], %s573
        // Predicated region
        $region49: #{multi_scale_tds_conv2d_block.1} parent=39 // pred_check
          %p575 = pneg %p149
        $region50: #{multi_scale_tds_conv2d_block.1} parent=39 // pred_check_branch
          %577 = sbr.rel (%p575) target = $region52
        $region51: #{multi_scale_tds_conv2d_block.1} parent=39 // pred_region
          %s579 = ssub.s32 128, 128
          %580 = vsyncadd %s571, %s579
          %s581 = smul.addr %s21, 2
          %s582 = smul.addr %s581, 64
          %s583 = scalar_lea.hbm %s5, %s582
          %s584 = sshll.u32 %s574, 4
          %s585 = int_to_ptr.vmem [resolvable:$true] %s584
          %590 = dma.vmem_to_hbm [thread:$0]  %s585, 128, %s583, %s571, 64, 64, 4
        $region52: #{multi_scale_tds_conv2d_block.1} parent=39 // pred_fallthru
          _
      $region40: #{multi_scale_tds_conv2d_block.1} parent=5 // pred_fallthru
        _
      %p591 = scmp.le.s32.totalorder 2, %s16
      // Predicated region
      $region53: #{multi_scale_tds_conv2d_block.1} parent=5 // pred_check
        %p592 = pneg %p591
      $region54: #{multi_scale_tds_conv2d_block.1} parent=5 // pred_check_branch
        %594 = sbr.rel (%p592) target = $region56
      $region55: #{multi_scale_tds_conv2d_block.1} parent=5 // pred_region
        %s595 = ssub.s32 %s16, 2
        // Predicated region
        $region57: #{multi_scale_tds_conv2d_block.1} parent=55 // pred_check
          %p596 = pneg %p155
        $region58: #{multi_scale_tds_conv2d_block.1} parent=55 // pred_check_branch
          %598 = sbr.rel (%p596) target = $region60
        $region59: #{multi_scale_tds_conv2d_block.1} parent=55 // pred_region
          %s599 = sand.u32 %s140, 1
          %s600 = scalar_lea.sflag [#allocation3], %s599
          %s601 = sand.u32 %s140, 1
          %s602 = smul.addr %s601, 8
          %s603 = scalar_lea.vmem [#allocation7], %s602
          %604 = dma.done %s600, 128
        $region60: #{multi_scale_tds_conv2d_block.1} parent=55 // pred_fallthru
          _
      $region56: #{multi_scale_tds_conv2d_block.1} parent=5 // pred_fallthru
        _
    $region6: #{multi_scale_tds_conv2d_block.1} parent=1 // loop_footer
      %s20 = sadd.s32 1, %s16
    $region7: #{multi_scale_tds_conv2d_block.1} parent=1 // loop_footer_branch
      %15 = sbr.rel target = $region3
    $region8: #{multi_scale_tds_conv2d_block.1} parent=1 // loop_exit
      _
    %605 = vsyncpa [#allocation3], 1
    %s606 = scalar_lea.sflag [#allocation3], 1
    %607 = vsyncpa %s606, 1
    %608 = vsyncpa [#allocation4], 1
    %s609 = scalar_lea.sflag [#allocation4], 1
    %610 = vsyncpa %s609, 1
    %611 = vsyncpa [#allocation6], 1

</llo_original>
